<compile_context>
chip_gen: v6e
topology: v6e:2x2x1
jax: 0.10.0
libtpu: 0.0.40
codegen_flags: <defaults>
</compile_context>

<pallas_src>
import functools

import numpy as np
import jax
import jax.numpy as jnp
from jax.experimental import pallas as pl
from jax.experimental.pallas import tpu as pltpu


# ------------------------------ config --------------------------------------
CONFIG = {
    'rmmodel': {
        'match_coarse': {'match_type': 'dual_softmax', 'sparse_spvs': False},
        'loss': {
            'coarse_type': 'focal',
            'focal_alpha': 0.25,
            'focal_gamma': 2.0,
            'pos_weight': 1.0,
            'neg_weight': 1.0,
            'fine_type': 'l2_with_std',
            'fine_correct_thr': 1.0,
            'coarse_weight': 1.0,
            'fine_weight': 1.0,
            'essential_weight': 0.1,
            'classif_weight': 0.1,
            'obj_geod_th': 1e-4,
        },
    }
}


# ----------------------- per-generation VMEM budgets -------------------------
def _tpu_vmem_capacity_bytes():
    try:
        info = pltpu.get_tpu_info()
        cap = getattr(info, "vmem_capacity_bytes", None)
        if cap:
            return int(cap)
    except Exception:
        pass
    return 128 * 1024 * 1024        # assume 128-MiB part if the query fails


_VMEM_CAP = _tpu_vmem_capacity_bytes()
if _VMEM_CAP >= 100 * 1024 * 1024:          # v5e / v6e (128 MiB / TC)
    _VMEM_LIMIT_BYTES = 48 * 1024 * 1024
    _TILE_BUDGET_BYTES = 28 * 1024 * 1024
else:                                       # v7x (64 MiB / TC)
    _VMEM_LIMIT_BYTES = 36 * 1024 * 1024
    _TILE_BUDGET_BYTES = 16 * 1024 * 1024


# ------------------------- coarse focal loss kernels -------------------------
def _coarse_focal_body(conf, gt, w, out_ref, *, gamma, nsub, s):
    conf = jnp.clip(conf.astype(jnp.float32), 1e-6, 1.0 - 1e-6)
    gt = gt.astype(jnp.float32)          # exact 0/1 -> doubles as the pos mask

    # Fused focal loss: for positives t = conf, for negatives t = 1 - conf.
    # Both branches are -alpha * (1-t)^gamma * log(t); (-alpha) is applied once
    # in the JAX finalize, so only ONE log + ONE pow per element here.
    t = jnp.where(gt == 1.0, conf, 1.0 - conf)      # single predicate
    omt = 1.0 - t
    mod = omt * omt if gamma == 2.0 else jnp.power(omt, gamma)   # trace-time branch
    loss = mod * jnp.log(t)
    if w is not None:
        loss = loss * w

    lpos = loss * gt                      # gt is binary -> pos mask == gt
    lneg = loss - lpos                    #              -> neg mask == 1 - gt

    ct = conf.shape[-1]

    def fold(v):
        # (1, RT, CT) -> (s, CT) sublane-group partials (VPU adds only); the
        # single cross-lane reduction is deferred to JAX.
        return jnp.sum(v.reshape(nsub, s, ct), axis=0)

    out_ref[0, 0, :, :] += fold(lpos)
    out_ref[0, 1, :, :] += fold(lneg)
    out_ref[0, 2, :, :] += fold(gt)


def _coarse_focal_kernel_masked(conf_ref, gt_ref, m0_ref, m1_ref, out_ref, *,
                                gamma, nsub, s):
    # out_ref is the per-(batch, col-tile) VMEM accumulator block, resident
    # across the innermost ("arbitrary") row-tile axis.
    @pl.when(pl.program_id(2) == 0)
    def _init():
        out_ref[...] = jnp.zeros_like(out_ref)

    # mask0 (1,RT,1) * mask1 (1,1,CT) -> (1,RT,CT)
    w = m0_ref[...].astype(jnp.float32) * m1_ref[...].astype(jnp.float32)
    _coarse_focal_body(conf_ref[...], gt_ref[...], w, out_ref,
                       gamma=gamma, nsub=nsub, s=s)


def _coarse_focal_kernel_nomask(conf_ref, gt_ref, out_ref, *, gamma, nsub, s):
    @pl.when(pl.program_id(2) == 0)
    def _init():
        out_ref[...] = jnp.zeros_like(out_ref)

    _coarse_focal_body(conf_ref[...], gt_ref[...], None, out_ref,
                       gamma=gamma, nsub=nsub, s=s)


def _pick_col_tile(hw1, max_cols=2048):
    """Column (lane) tile: full HW1 when small, else the largest multiple-of-128
    divisor <= max_cols (keeps v7x under its 64 MiB VMEM with large HW1)."""
    if hw1 <= max_cols:
        return hw1
    best = None
    for ct in range(128, max_cols + 1, 128):
        if hw1 % ct == 0:
            best = ct
    # TODO(synk): real LoFTR HW1 (e.g. 4800) has no multiple-of-128 divisor; the
    # producer should pad HW1 to a multiple of 128 for lane-dense blocks.
    return best if best is not None else hw1


def _pick_row_tile(hw0, col_tile, in_bytes, budget_bytes):
    """Largest multiple-of-8 divisor of hw0 (capped at 512) whose estimated
    double-buffered + temporary VMEM footprint fits the budget."""
    def footprint(rt):
        # conf+gt: 2 pipeline buffers each, ~6 f32 temporaries per element,
        # plus the double-buffered (3, 8, col_tile) f32 output block.
        return (4 * rt * col_tile * in_bytes
                + 6 * rt * col_tile * 4
                + 2 * 3 * 8 * col_tile * 4)

    cands = [rt for rt in range(8, min(hw0, 512) + 1, 8) if hw0 % rt == 0]
    if not cands:
        return hw0                      # tiny / odd HW0: take it whole
    fitting = [rt for rt in cands if footprint(rt) <= budget_bytes]
    return max(fitting) if fitting else min(cands)


def coarse_focal_loss(conf, conf_gt, m0=None, m1=None, *, alpha, gamma,
                      pos_w, neg_w, row_tile=None, col_tile=None):
    N, HW0, HW1 = conf.shape
    has_mask = m0 is not None

    if col_tile is None:
        col_tile = _pick_col_tile(HW1)
    assert HW1 % col_tile == 0
    in_bytes = conf.dtype.itemsize + conf_gt.dtype.itemsize
    if row_tile is None:
        row_tile = _pick_row_tile(HW0, col_tile, in_bytes, _TILE_BUDGET_BYTES)
    assert HW0 % row_tile == 0
    s = 8 if row_tile % 8 == 0 else row_tile
    nsub = row_tile // s

    # grid: (batch, col-tiles, row-tiles); reduction (rows) last, the two
    # independent axes "parallel" so v7x megacore gets work even when N == 1.
    grid = (N, HW1 // col_tile, HW0 // row_tile)

    conf_spec = pl.BlockSpec((1, row_tile, col_tile), lambda n, c, r: (n, r, c))
    gt_spec = pl.BlockSpec((1, row_tile, col_tile), lambda n, c, r: (n, r, c))
    out_spec = pl.BlockSpec((1, 3, s, col_tile), lambda n, c, r: (n, 0, 0, c))

    if has_mask:
        kernel = functools.partial(_coarse_focal_kernel_masked,
                                   gamma=gamma, nsub=nsub, s=s)
        in_specs = [conf_spec, gt_spec,
                    pl.BlockSpec((1, row_tile, 1), lambda n, c, r: (n, r, 0)),
                    pl.BlockSpec((1, 1, col_tile), lambda n, c, r: (n, 0, c))]
        args = (conf, conf_gt, m0, m1)
    else:
        kernel = functools.partial(_coarse_focal_kernel_nomask,
                                   gamma=gamma, nsub=nsub, s=s)
        in_specs = [conf_spec, gt_spec]
        args = (conf, conf_gt)

    partials = pl.pallas_call(
        kernel,
        out_shape=jax.ShapeDtypeStruct((N, 3, s, HW1), jnp.float32),
        grid_spec=pltpu.PrefetchScalarGridSpec(
            num_scalar_prefetch=0,
            grid=grid,
            in_specs=in_specs,
            out_specs=out_spec,
        ),
        compiler_params=pltpu.CompilerParams(
            dimension_semantics=("parallel", "parallel", "arbitrary"),
            vmem_limit_bytes=_VMEM_LIMIT_BYTES),
    )(*args)

    sums = jnp.sum(partials, axis=(0, 2, 3))                 # (3,)
    pos_sum, neg_sum, pos_cnt = sums[0], sums[1], sums[2]
    neg_cnt = float(N * HW0 * HW1) - pos_cnt                  # gt is binary 0/1
    # torch edge case (no pos / no neg) forces one dummy entry with zero weight
    # and zero class weight -> that term is exactly 0; jnp.where reproduces it.
    # (-alpha) hoisted here from the per-element kernel expression.
    loss_pos_mean = jnp.where(pos_cnt > 0,
                              (-alpha) * pos_sum / jnp.maximum(pos_cnt, 1.0), 0.0)
    loss_neg_mean = jnp.where(neg_cnt > 0,
                              (-alpha) * neg_sum / jnp.maximum(neg_cnt, 1.0), 0.0)
    return pos_w * loss_pos_mean + neg_w * loss_neg_mean


# ------------------------- fine l2-with-std kernel ---------------------------
def _fine_l2_std_kernel(ef_ref, gt_ref, out_ref, *, correct_thr, m):
    ef = ef_ref[...].astype(jnp.float32)     # (M, 3)
    gt = gt_ref[...].astype(jnp.float32)     # (M, 2)
    gx = gt[:, 0:1]
    gy = gt[:, 1:2]
    correct = (jnp.maximum(jnp.abs(gx), jnp.abs(gy)) < correct_thr)
    correct = correct.astype(jnp.float32)
    std = ef[:, 2:3]
    inv_std = 1.0 / jnp.maximum(std, 1e-10)
    mean_inv = jnp.sum(inv_std) / m
    # TODO(synk): torch detaches this weight; a custom VJP is needed before
    # this path is used under jax.grad (forward value is identical).
    weight = inv_std / mean_inv
    off = (gx - ef[:, 0:1]) ** 2 + (gy - ef[:, 1:2]) ** 2
    out_ref[0] = jnp.sum(off * weight * correct)
    out_ref[1] = jnp.sum(correct)


def fine_l2_std_loss(expec_f, expec_f_gt, *, correct_thr):
    # TODO(synk): if M grows into the thousands, feed transposed (3,M)/(2,M)
    # inputs so M sits on the lane axis; irrelevant at small M.
    M = expec_f.shape[0]
    kernel = functools.partial(_fine_l2_std_kernel, correct_thr=correct_thr,
                               m=float(M))
    sums = pl.pallas_call(
        kernel,
        out_shape=jax.ShapeDtypeStruct((2,), jnp.float32),
        in_specs=[pl.BlockSpec(memory_space=pltpu.MemorySpace.VMEM)] * 2,
        out_specs=pl.BlockSpec(memory_space=pltpu.MemorySpace.SMEM),
    )(expec_f, expec_f_gt)
    # torch: if no correct match, training path forces mask[0]=True, weight[0]=0
    # -> loss becomes 0.  (eval path would return None.)
    return jnp.where(sums[1] > 0, sums[0] / jnp.maximum(sums[1], 1.0), 0.0)


# --------------------- descriptor nearest-neighbour kernel -------------------
def _nn_kernel(di_ref, djb_ref, djn_ref, idx_ref, *, kj):
    di = di_ref[...].astype(jnp.bfloat16)    # (KT, D)  tile of desc_i rows
    djb = djb_ref[...]                       # (Kj, D)  bf16, resident across steps
    d2 = djn_ref[...]                        # (Kj, 1)  f32 squared norms, resident
    # bf16 MXU matmul (native path on all gens), f32 accumulation; only the
    # argmin ranking matters so bf16 precision is fine.
    cross = jax.lax.dot_general(djb, di, (((1,), (1,)), ((), ())),
                                preferred_element_type=jnp.float32)  # (Kj, KT)
    # argmin_j of sqrt(d1 + d2 - 2*<di,dj>) == argmin_j of (d2 - 2*<di,dj>)
    score = d2 - 2.0 * cross
    row = jax.lax.broadcasted_iota(jnp.float32, score.shape, 0)
    minval = jnp.min(score, axis=0, keepdims=True)                   # (1, KT)
    idx = jnp.min(jnp.where(score == minval, row, float(kj)),
                  axis=0, keepdims=True)                             # (1, KT)
    idx_ref[...] = idx.astype(jnp.int32)                             # lane-dense


def nearest_neighbor_idx(desc_i, desc_j):
    K, D = desc_i.shape
    Kj = desc_j.shape[0]

    # Hoisted once (review): bf16 copy of desc_j and its squared norms are
    # computed in the wrapper instead of being recomputed every grid step.
    dj_bf16 = desc_j.astype(jnp.bfloat16)
    dj_norm2 = jnp.sum(desc_j.astype(jnp.float32) ** 2,
                       axis=1, keepdims=True)                        # (Kj, 1)

    if K % 256 == 0:
        ktile = 256
    elif K % 128 == 0:
        ktile = 128
    else:
        ktile = K   # TODO(synk): very large K that is not a multiple of 128 stays untiled
    grid = (K // ktile,)
    kernel = functools.partial(_nn_kernel, kj=Kj)
    idx = pl.pallas_call(
        kernel,
        out_shape=jax.ShapeDtypeStruct((1, K), jnp.int32),
        grid_spec=pltpu.PrefetchScalarGridSpec(
            num_scalar_prefetch=0,
            grid=grid,
            in_specs=[
                pl.BlockSpec((ktile, D), lambda i: (i, 0)),
                pl.BlockSpec((Kj, D), lambda i: (0, 0)),    # desc_j resident
                pl.BlockSpec((Kj, 1), lambda i: (0, 0)),    # norms resident
            ],
            out_specs=pl.BlockSpec((1, ktile), lambda i: (0, i)),
        ),
        compiler_params=pltpu.CompilerParams(
            dimension_semantics=("parallel",),
            vmem_limit_bytes=_VMEM_LIMIT_BYTES),
    )(desc_i, dj_bf16, dj_norm2)
    # TODO(synk): for very large Kj, add a Kj reduction axis with a running
    # (min, argmin) VMEM scratch instead of keeping desc_j fully resident.
    return idx[0]


# ----------------------- classification-loss kernel --------------------------
def _classif_kernel(g_ref, y_ref, out_ref, *, obj_geod_th, num_heads):
    gg = g_ref[...].astype(jnp.float32)   # (1, K) geodesic distances
    yy = y_ref[...].astype(jnp.float32)   # (L, K) all logit heads, batched
    is_pos = (gg < obj_geod_th).astype(jnp.float32)
    is_neg = 1.0 - is_pos
    c = is_pos - is_neg                   # (+1 / -1)
    # -log(sigmoid(c*y) + eps)  ->  stable softplus(-c*y); the double-precision
    # eps (2.2e-16) is absorbed at f32 anyway.
    z = -c * yy
    losses = jnp.maximum(z, 0.0) + jnp.log(1.0 + jnp.exp(-jnp.abs(z)))
    for l in range(num_heads):
        out_ref[2 * l] = jnp.sum(losses[l:l + 1, :] * is_pos)
        out_ref[2 * l + 1] = jnp.sum(losses[l:l + 1, :] * is_neg)
    out_ref[2 * num_heads] = jnp.sum(is_pos)
    out_ref[2 * num_heads + 1] = jnp.sum(is_neg)


def classif_losses_from_geod(geod, y_hat_list, *, obj_geod_th):
    """All y_hat heads in ONE pallas_call; returns a (L,) vector of losses."""
    K = geod.shape[0]
    L = len(y_hat_list)
    g = geod.reshape(1, K).astype(jnp.float32)
    y = jnp.stack([jnp.reshape(yh, (K,)) for yh in y_hat_list], axis=0)
    y = y.astype(jnp.float32)                      # (L, K)
    kernel = functools.partial(_classif_kernel, obj_geod_th=obj_geod_th,
                               num_heads=L)
    s = pl.pallas_call(
        kernel,
        out_shape=jax.ShapeDtypeStruct((2 * L + 2,), jnp.float32),
        in_specs=[pl.BlockSpec(memory_space=pltpu.MemorySpace.VMEM)] * 2,
        out_specs=pl.BlockSpec(memory_space=pltpu.MemorySpace.SMEM),
    )(g, y)
    num_pos = jax.nn.relu(s[2 * L] - 1.0) + 1.0
    num_neg = jax.nn.relu(s[2 * L + 1] - 1.0) + 1.0
    pair = s[:2 * L].reshape(L, 2)
    return pair[:, 0] * 0.5 / num_pos + pair[:, 1] * 0.5 / num_neg   # (L,)


# ------------------------- small JAX geometry glue ---------------------------
def jax_skew_symmetric(v):  # v: (B, 3) -> (B, 9)
    zero = jnp.zeros_like(v[:, 0])
    return jnp.stack([zero, -v[:, 2], v[:, 1],
                      v[:, 2], zero, -v[:, 0],
                      -v[:, 1], v[:, 0], zero], axis=1)


def unpack_K_jax(img_shape, K):
    h, w = img_shape[2], img_shape[3]
    cx = (w - 1.0) * 0.5 + K[0, 2]
    cy = (h - 1.0) * 0.5 + K[1, 2]
    return cx, cy, (K[0, 0], K[1, 1])


def norm_kp_jax(cx, cy, fx, fy, kp):
    center = jnp.stack([cx, cy]).reshape(1, 2)
    focal = jnp.stack([fx, fy]).reshape(1, 2)
    return (kp - center) / focal


def get_episym_jax(x1, x2, dR, dt):
    num_pts = x1.shape[0]
    x1h = jnp.concatenate([x1, jnp.ones((num_pts, 1), x1.dtype)], -1).reshape(-1, 3, 1)
    x2h = jnp.concatenate([x2, jnp.ones((num_pts, 1), x2.dtype)], -1).reshape(-1, 3, 1)
    F = jnp.matmul(jax_skew_symmetric(dt.reshape(1, 3)).reshape(1, 3, 3),
                   dR.reshape(1, 3, 3))                   # (1,3,3), broadcast over pts
    x2Fx1 = jnp.matmul(jnp.transpose(x2h, (0, 2, 1)), jnp.matmul(F, x1h)).reshape(-1)
    Fx1 = jnp.matmul(F, x1h).reshape(-1, 3)
    Ftx2 = jnp.matmul(jnp.transpose(F, (0, 2, 1)), x2h).reshape(-1, 3)
    ys = x2Fx1 ** 2 * (1.0 / (Fx1[:, 0] ** 2 + Fx1[:, 1] ** 2) +
                       1.0 / (Ftx2[:, 0] ** 2 + Ftx2[:, 1] ** 2))
    return ys


def classification_gt_jax(data, kp_i, kp_j):
    cx1, cy1, f1 = unpack_K_jax(data['image0'].shape, data['K0'][0])
    cx2, cy2, f2 = unpack_K_jax(data['image1'].shape, data['K1'][0])
    x1 = norm_kp_jax(cx1, cy1, f1[0], f1[1], kp_i)
    x2 = norm_kp_jax(cx2, cy2, f2[0], f2[1], kp_j)
    R_i = data['T_0to1'][0, :3, :3]
    R_j = data['T_1to0'][0, :3, :3]
    dR = R_j @ R_i.T
    t_i = data['T_0to1'][0, :3, 3].reshape(3, 1)
    t_j = data['T_1to0'][0, :3, 3].reshape(3, 1)
    dt = t_j - dR @ t_i
    dtnorm = jnp.sqrt(jnp.sum(dt ** 2))
    # TODO(synk): torch path returns [] when |dt| <= 1e-5 (data-dependent early
    # exit); assumed non-degenerate geometry here.
    dt = dt / dtnorm
    nn_idx = nearest_neighbor_idx(data['desc0_orn'], data['desc1_orn'])  # Pallas
    x2 = x2[nn_idx, :]
    return get_episym_jax(x1, x2, dR, dt)   # (K,)


def essential_matrix_loss_jax(T_0to1, e_hat):
    R_gt = T_0to1[:, :3, :3]
    t_gt = T_0to1[:, :3, 3]
    e_gt_unnorm = jnp.matmul(jax_skew_symmetric(t_gt).reshape(-1, 3, 3),
                             R_gt).reshape(-1, 9)
    e_gt = e_gt_unnorm / jnp.sqrt(jnp.sum(e_gt_unnorm ** 2, axis=1, keepdims=True))
    return jnp.mean(jnp.minimum(jnp.sum((e_hat - e_gt) ** 2, axis=1),
                                jnp.sum((e_hat + e_gt) ** 2, axis=1)))


# ------------------------------ loss module ----------------------------------
class RMmodelLossPallas:
    def __init__(self, config):
        self.config = config
        self.loss_config = config['rmmodel']['loss']
        self.match_type = config['rmmodel']['match_coarse']['match_type']
        self.sparse_spvs = config['rmmodel']['match_coarse']['sparse_spvs']
        # only the dense focal + l2_with_std configuration is implemented
        assert self.loss_config['coarse_type'] == 'focal' and not self.sparse_spvs
        assert self.loss_config['fine_type'] == 'l2_with_std'

    def __call__(self, data):
        lc = self.loss_config
        loss_scalars = {}

        conf = data['conf_matrix']
        conf_gt = data['conf_matrix_gt']
        N, HW0, HW1 = conf.shape
        if 'mask0' in data:
            m0 = data['mask0'].reshape(N, HW0, 1)
            m1 = data['mask1'].reshape(N, 1, HW1)
        else:
            m0 = m1 = None          # trace-time mask-free kernel variant

        loss_c = coarse_focal_loss(
            conf, conf_gt, m0, m1,
            alpha=lc['focal_alpha'], gamma=lc['focal_gamma'],
            pos_w=lc['pos_weight'], neg_w=lc['neg_weight'])
        loss = loss_c * lc['coarse_weight']
        loss_scalars['loss_c'] = loss_c

        loss_f = fine_l2_std_loss(data['expec_f'], data['expec_f_gt'],
                                  correct_thr=lc['fine_correct_thr'])
        loss = loss + loss_f * lc['fine_weight']
        loss_scalars['loss_f'] = loss_f

        if data['e_hat'] is not None:
            for e_hat in data['e_hat']:
                # tiny (B, 9) algebra -> plain JAX glue
                ess = essential_matrix_loss_jax(data['T_0to1'], e_hat)
                loss = loss + lc['essential_weight'] * ess
                loss_scalars['loss_ess'] = ess

        if data['y_hat'] is not None:
            if data['mkpts0_orn'].shape[0] >= 2:
                # geodesic GT depends only on data -> compute once; all heads
                # batched into a single classification kernel launch.
                geod = classification_gt_jax(data, data['mkpts0_orn'],
                                             data['mkpts1_orn'])
                cls = classif_losses_from_geod(geod, data['y_hat'],
                                               obj_geod_th=lc['obj_geod_th'])
                for l in range(len(data['y_hat'])):
                    loss = loss + lc['classif_weight'] * cls[l]
                    loss_scalars['loss_classif'] = cls[l]
            else:
                # torch: < 2 keypoints -> classif_loss = 0
                loss_scalars['loss_classif'] = jnp.float32(0.0)

        loss_scalars['loss'] = loss
        data['loss'] = loss
        data['loss_scalars'] = loss_scalars
        return loss


# --------------------------------- main --------------------------------------
def _rot_z(a):
    c, s = np.cos(a), np.sin(a)
    return np.array([[c, -s, 0], [s, c, 0], [0, 0, 1]], np.float32)


def _rot_x(a):
    c, s = np.cos(a), np.sin(a)
    return np.array([[1, 0, 0], [0, c, -s], [0, s, c]], np.float32)


if __name__ == "__main__":
    key = jax.random.PRNGKey(0)
    ks = jax.random.split(key, 12)

    N, h0, w0, h1, w1 = 2, 8, 8, 8, 8
    HW0, HW1 = h0 * w0, h1 * w1
    M = 64          # number of fine matches
    K_pts, D = 64, 32

    # coarse matching data (gt / masks are exact 0/1 -> bf16 is lossless and
    # halves the HBM bytes the focal kernel has to read; conf may also be bf16
    # if the producer emits it — the kernel casts to f32 internally)
    conf_matrix = jax.nn.sigmoid(jax.random.normal(ks[0], (N, HW0, HW1), jnp.float32))
    conf_matrix_gt = (jax.random.uniform(ks[1], (N, HW0, HW1)) < 0.03).astype(jnp.bfloat16)
    mask0 = jnp.ones((N, h0, w0), jnp.bfloat16).at[:, -1, :].set(0)
    mask1 = jnp.ones((N, h1, w1), jnp.bfloat16).at[:, :, -1].set(0)

    # fine matching data
    expec_xy = 0.3 * jax.random.normal(ks[2], (M, 2), jnp.float32)
    expec_std = jnp.abs(jax.random.normal(ks[3], (M, 1), jnp.float32)) * 0.5 + 0.1
    expec_f = jnp.concatenate([expec_xy, expec_std], axis=-1)           # (M, 3)
    expec_f_gt = jax.random.uniform(ks[4], (M, 2), jnp.float32, -0.6, 0.6)

    # poses / intrinsics
    T_0to1_np = np.zeros((N, 4, 4), np.float32)
    T_1to0_np = np.zeros((N, 4, 4), np.float32)
    for b in range(N):
        R = _rot_z(0.2 + 0.05 * b) @ _rot_x(0.1)
        t = np.array([0.1, -0.05, 0.3 + 0.1 * b], np.float32)
        T = np.eye(4, dtype=np.float32)
        T[:3, :3] = R
        T[:3, 3] = t
        T_0to1_np[b] = T
        T_1to0_np[b] = np.linalg.inv(T).astype(np.float32)
    T_0to1 = jnp.asarray(T_0to1_np)
    T_1to0 = jnp.asarray(T_1to0_np)

    K0 = jnp.array([[[100.0, 0.0, 2.0], [0.0, 100.0, -1.0], [0.0, 0.0, 1.0]]], jnp.float32)
    K1 = jnp.array([[[100.0, 0.0, -2.0], [0.0, 100.0, 1.0], [0.0, 0.0, 1.0]]], jnp.float32)
    image0 = jnp.zeros((1, 1, 32, 32), jnp.float32)   # only the shape is used
    image1 = jnp.zeros((1, 1, 32, 32), jnp.float32)

    # descriptors / keypoints / predictions
    desc0_orn = jax.random.normal(ks[5], (K_pts, D), jnp.float32)
    desc1_orn = jax.random.normal(ks[6], (K_pts, D), jnp.float32)
    mkpts0_orn = jax.random.uniform(ks[7], (K_pts, 2), jnp.float32, 0.0, 31.0)
    mkpts1_orn = jax.random.uniform(ks[8], (K_pts, 2), jnp.float32, 0.0, 31.0)
    e_hat_raw = jax.random.normal(ks[9], (N, 9), jnp.float32)
    e_hat = [e_hat_raw / jnp.sqrt(jnp.sum(e_hat_raw ** 2, axis=1, keepdims=True))]
    y_hat = [jax.random.normal(ks[10], (K_pts,), jnp.float32)]

    data = {
        'conf_matrix': conf_matrix,
        'conf_matrix_gt': conf_matrix_gt,
        'mask0': mask0,
        'mask1': mask1,
        'expec_f': expec_f,
        'expec_f_gt': expec_f_gt,
        'T_0to1': T_0to1,
        'T_1to0': T_1to0,
        'K0': K0,
        'K1': K1,
        'image0': image0,
        'image1': image1,
        'desc0_orn': desc0_orn,
        'desc1_orn': desc1_orn,
        'mkpts0_orn': mkpts0_orn,
        'mkpts1_orn': mkpts1_orn,
        'e_hat': e_hat,
        'y_hat': y_hat,
    }

    loss_module = RMmodelLossPallas(CONFIG)
    loss = loss_module(data)
    loss = jax.block_until_ready(loss)

    # also exercise the mask-free coarse kernel variant (trace-time path)
    lc = CONFIG['rmmodel']['loss']
    loss_c_nomask = coarse_focal_loss(
        conf_matrix, conf_matrix_gt,
        alpha=lc['focal_alpha'], gamma=lc['focal_gamma'],
        pos_w=lc['pos_weight'], neg_w=lc['neg_weight'])
    loss_c_nomask = jax.block_until_ready(loss_c_nomask)

    if not (bool(jnp.isfinite(loss)) and bool(jnp.isfinite(loss_c_nomask))):
        raise RuntimeError("non-finite loss")
    print("KERNEL_OK")
</pallas_src>

<mosaic_0001>
module attributes {stable_mosaic.version = 11 : i64} {
  func.func @_coarse_focal_kernel_masked(%arg0: i32, %arg1: i32, %arg2: i32, %arg3: memref<1x64x64xf32, #tpu.memory_space<vmem>>, %arg4: memref<1x64x64xbf16, #tpu.memory_space<vmem>>, %arg5: memref<1x64x1xbf16, #tpu.memory_space<vmem>>, %arg6: memref<1x1x64xbf16, #tpu.memory_space<vmem>>, %arg7: memref<1x3x8x64xf32, #tpu.memory_space<vmem>>) attributes {dimension_semantics = [#tpu.dimension_semantics<parallel>, #tpu.dimension_semantics<parallel>, #tpu.dimension_semantics<arbitrary>], iteration_bounds = array<i64: 2, 1, 1>, scalar_prefetch = 0 : i64, scratch_operands = 0 : i64, tpu.core_type = #tpu.core_type<tc>, window_params = [{transform_indices = @transform_0, window_bounds = array<i64: 1, 64, 64>}, {transform_indices = @transform_1, window_bounds = array<i64: 1, 64, 64>}, {transform_indices = @transform_2, window_bounds = array<i64: 1, 64, 1>}, {transform_indices = @transform_3, window_bounds = array<i64: 1, 1, 64>}, {transform_indices = @transform_4, window_bounds = array<i64: 1, 3, 8, 64>}]} {
    %c0_i32 = arith.constant 0 : i32
    %0 = arith.cmpi eq, %arg2, %c0_i32 : i32
    %1 = arith.extui %0 : i1 to i32
    %c0_i32_0 = arith.constant 0 : i32
    %2 = arith.cmpi ne, %1, %c0_i32_0 : i32
    scf.if %2 {
      %cst_41 = arith.constant 0.000000e+00 : f32
      %54 = vector.broadcast %cst_41 : f32 to vector<1x3x8x64xf32>
      %c0_42 = arith.constant 0 : index
      %c0_43 = arith.constant 0 : index
      %c0_44 = arith.constant 0 : index
      %c0_45 = arith.constant 0 : index
      %55 = vector.load %arg7[%c0_42, %c0_43, %c0_44, %c0_45] : memref<1x3x8x64xf32, #tpu.memory_space<vmem>>, vector<1x3x8x64xf32>
      tpu.vector_store %arg7[%c0_42, %c0_43, %c0_44, %c0_45], %54 {strides = array<i32>} : memref<1x3x8x64xf32, #tpu.memory_space<vmem>>, vector<1x3x8x64xf32>,
    } else {
    }
    %c0 = arith.constant 0 : index
    %c0_1 = arith.constant 0 : index
    %c0_2 = arith.constant 0 : index
    %3 = vector.load %arg5[%c0, %c0_1, %c0_2] : memref<1x64x1xbf16, #tpu.memory_space<vmem>>, vector<1x64x1xbf16>
    %4 = arith.extf %3 : vector<1x64x1xbf16> to vector<1x64x1xf32>
    %c0_3 = arith.constant 0 : index
    %c0_4 = arith.constant 0 : index
    %c0_5 = arith.constant 0 : index
    %5 = vector.load %arg6[%c0_3, %c0_4, %c0_5] : memref<1x1x64xbf16, #tpu.memory_space<vmem>>, vector<1x1x64xbf16>
    %6 = arith.extf %5 : vector<1x1x64xbf16> to vector<1x1x64xf32>
    %7 = vector.broadcast %4 : vector<1x64x1xf32> to vector<1x64x64xf32>
    %8 = vector.broadcast %6 : vector<1x1x64xf32> to vector<1x64x64xf32>
    %9 = arith.mulf %7, %8 : vector<1x64x64xf32>
    %c0_6 = arith.constant 0 : index
    %c0_7 = arith.constant 0 : index
    %c0_8 = arith.constant 0 : index
    %10 = vector.load %arg3[%c0_6, %c0_7, %c0_8] : memref<1x64x64xf32, #tpu.memory_space<vmem>>, vector<1x64x64xf32>
    %c0_9 = arith.constant 0 : index
    %c0_10 = arith.constant 0 : index
    %c0_11 = arith.constant 0 : index
    %11 = vector.load %arg4[%c0_9, %c0_10, %c0_11] : memref<1x64x64xbf16, #tpu.memory_space<vmem>>, vector<1x64x64xbf16>
    %cst = arith.constant 9.99999997E-7 : f32
    %cst_12 = arith.constant 0.999998986 : f32
    %12 = vector.broadcast %cst : f32 to vector<1x64x64xf32>
    %13 = arith.maximumf %12, %10 : vector<1x64x64xf32>
    %14 = vector.broadcast %cst_12 : f32 to vector<1x64x64xf32>
    %15 = arith.minimumf %14, %13 : vector<1x64x64xf32>
    %16 = arith.extf %11 : vector<1x64x64xbf16> to vector<1x64x64xf32>
    %cst_13 = arith.constant 1.000000e+00 : f32
    %17 = vector.broadcast %cst_13 : f32 to vector<1x64x64xf32>
    %18 = arith.cmpf oeq, %16, %17 : vector<1x64x64xf32>
    %cst_14 = arith.constant 1.000000e+00 : f32
    %19 = vector.broadcast %cst_14 : f32 to vector<1x64x64xf32>
    %20 = arith.subf %19, %15 : vector<1x64x64xf32>
    %21 = arith.select %18, %15, %20 : vector<1x64x64xi1>, vector<1x64x64xf32>
    %cst_15 = arith.constant 1.000000e+00 : f32
    %22 = vector.broadcast %cst_15 : f32 to vector<1x64x64xf32>
    %23 = arith.subf %22, %21 : vector<1x64x64xf32>
    %24 = arith.mulf %23, %23 : vector<1x64x64xf32>
    %25 = math.log %21 : vector<1x64x64xf32>
    %26 = arith.mulf %24, %25 : vector<1x64x64xf32>
    %27 = arith.mulf %26, %9 : vector<1x64x64xf32>
    %28 = arith.mulf %27, %16 : vector<1x64x64xf32>
    %29 = arith.subf %27, %28 : vector<1x64x64xf32>
    %c0_16 = arith.constant 0 : index
    %c0_17 = arith.constant 0 : index
    %c0_18 = arith.constant 0 : index
    %c0_19 = arith.constant 0 : index
    %30 = vector.load %arg7[%c0_16, %c0_17, %c0_18, %c0_19] : memref<1x3x8x64xf32, #tpu.memory_space<vmem>>, vector<1x1x8x64xf32>
    %31 = vector.shape_cast %30 : vector<1x1x8x64xf32> to vector<8x64xf32>
    %32 = vector.shape_cast %28 : vector<1x64x64xf32> to vector<8x8x64xf32>
    %cst_20 = arith.constant dense<0.000000e+00> : vector<8x64xf32>
    %33 = vector.multi_reduction <add>, %32, %cst_20 [0] : vector<8x8x64xf32> to vector<8x64xf32>
    %34 = arith.addf %31, %33 : vector<8x64xf32>
    %c0_21 = arith.constant 0 : index
    %c0_22 = arith.constant 0 : index
    %c0_23 = arith.constant 0 : index
    %c0_24 = arith.constant 0 : index
    %35 = vector.load %arg7[%c0_21, %c0_22, %c0_23, %c0_24] : memref<1x3x8x64xf32, #tpu.memory_space<vmem>>, vector<1x1x8x64xf32>
    %36 = vector.shape_cast %35 : vector<1x1x8x64xf32> to vector<8x64xf32>
    %37 = vector.shape_cast %34 : vector<8x64xf32> to vector<1x1x8x64xf32>
    tpu.vector_store %arg7[%c0_21, %c0_22, %c0_23, %c0_24], %37 {strides = array<i32>} : memref<1x3x8x64xf32, #tpu.memory_space<vmem>>, vector<1x1x8x64xf32>,
    %c0_25 = arith.constant 0 : index
    %c1 = arith.constant 1 : index
    %c0_26 = arith.constant 0 : index
    %c0_27 = arith.constant 0 : index
    %38 = vector.load %arg7[%c0_25, %c1, %c0_26, %c0_27] : memref<1x3x8x64xf32, #tpu.memory_space<vmem>>, vector<1x1x8x64xf32>
    %39 = vector.shape_cast %38 : vector<1x1x8x64xf32> to vector<8x64xf32>
    %40 = vector.shape_cast %29 : vector<1x64x64xf32> to vector<8x8x64xf32>
    %cst_28 = arith.constant dense<0.000000e+00> : vector<8x64xf32>
    %41 = vector.multi_reduction <add>, %40, %cst_28 [0] : vector<8x8x64xf32> to vector<8x64xf32>
    %42 = arith.addf %39, %41 : vector<8x64xf32>
    %c0_29 = arith.constant 0 : index
    %c1_30 = arith.constant 1 : index
    %c0_31 = arith.constant 0 : index
    %c0_32 = arith.constant 0 : index
    %43 = vector.load %arg7[%c0_29, %c1_30, %c0_31, %c0_32] : memref<1x3x8x64xf32, #tpu.memory_space<vmem>>, vector<1x1x8x64xf32>
    %44 = vector.shape_cast %43 : vector<1x1x8x64xf32> to vector<8x64xf32>
    %45 = vector.shape_cast %42 : vector<8x64xf32> to vector<1x1x8x64xf32>
    tpu.vector_store %arg7[%c0_29, %c1_30, %c0_31, %c0_32], %45 {strides = array<i32>} : memref<1x3x8x64xf32, #tpu.memory_space<vmem>>, vector<1x1x8x64xf32>,
    %c0_33 = arith.constant 0 : index
    %c2 = arith.constant 2 : index
    %c0_34 = arith.constant 0 : index
    %c0_35 = arith.constant 0 : index
    %46 = vector.load %arg7[%c0_33, %c2, %c0_34, %c0_35] : memref<1x3x8x64xf32, #tpu.memory_space<vmem>>, vector<1x1x8x64xf32>
    %47 = vector.shape_cast %46 : vector<1x1x8x64xf32> to vector<8x64xf32>
    %48 = vector.shape_cast %16 : vector<1x64x64xf32> to vector<8x8x64xf32>
    %cst_36 = arith.constant dense<0.000000e+00> : vector<8x64xf32>
    %49 = vector.multi_reduction <add>, %48, %cst_36 [0] : vector<8x8x64xf32> to vector<8x64xf32>
    %50 = arith.addf %47, %49 : vector<8x64xf32>
    %c0_37 = arith.constant 0 : index
    %c2_38 = arith.constant 2 : index
    %c0_39 = arith.constant 0 : index
    %c0_40 = arith.constant 0 : index
    %51 = vector.load %arg7[%c0_37, %c2_38, %c0_39, %c0_40] : memref<1x3x8x64xf32, #tpu.memory_space<vmem>>, vector<1x1x8x64xf32>
    %52 = vector.shape_cast %51 : vector<1x1x8x64xf32> to vector<8x64xf32>
    %53 = vector.shape_cast %50 : vector<8x64xf32> to vector<1x1x8x64xf32>
    tpu.vector_store %arg7[%c0_37, %c2_38, %c0_39, %c0_40], %53 {strides = array<i32>} : memref<1x3x8x64xf32, #tpu.memory_space<vmem>>, vector<1x1x8x64xf32>,
    return
  }
  func.func @transform_0(%arg0: i32, %arg1: i32, %arg2: i32) -> (i32, i32, i32) {
    %c0_i32 = arith.constant 0 : i32
    return %arg0, %arg2, %arg1 : i32, i32, i32
  }
  func.func @transform_1(%arg0: i32, %arg1: i32, %arg2: i32) -> (i32, i32, i32) {
    %c0_i32 = arith.constant 0 : i32
    return %arg0, %arg2, %arg1 : i32, i32, i32
  }
  func.func @transform_2(%arg0: i32, %arg1: i32, %arg2: i32) -> (i32, i32, i32) {
    %c0_i32 = arith.constant 0 : i32
    %c0_i32_0 = arith.constant 0 : i32
    return %arg0, %arg2, %c0_i32 : i32, i32, i32
  }
  func.func @transform_3(%arg0: i32, %arg1: i32, %arg2: i32) -> (i32, i32, i32) {
    %c0_i32 = arith.constant 0 : i32
    %c0_i32_0 = arith.constant 0 : i32
    return %arg0, %c0_i32, %arg1 : i32, i32, i32
  }
  func.func @transform_4(%arg0: i32, %arg1: i32, %arg2: i32) -> (i32, i32, i32, i32) {
    %c0_i32 = arith.constant 0 : i32
    %c0_i32_0 = arith.constant 0 : i32
    %c0_i32_1 = arith.constant 0 : i32
    return %arg0, %c0_i32, %c0_i32_0, %arg1 : i32, i32, i32, i32
  }
}

</mosaic_0001>

<llo_original>
// kernel: tpu_custom_call.1
$region0: #{tpu_custom_call.1}
  #allocation0 [shape = 'u32[]', space=smem, size = 0x4, offset = 0x4, fixed_abs, tag = 'smem constant byte address 0x4 - core index']
  #allocation1 [shape = 'u32[144,128]{1,0:T(1,128)}', space=vmem, size = 0x12000, scoped, tag = 'internal scratch']
  %s0 = inlined_call_operand.hbm [shape: f32[2,64,64], index: 0, kind: input, shape index: {}]
  %s1 = inlined_call_operand.vmem [shape: bf16[2,64,64], index: 1, kind: input, shape index: {}]
  %s2 = inlined_call_operand.vmem [shape: bf16[2,64,1], index: 2, kind: input, shape index: {}]
  %s3 = inlined_call_operand.vmem [shape: bf16[2,1,64], index: 3, kind: input, shape index: {}]
  %s4 = inlined_call_operand.hbm [shape: f32[2,3,8,64], index: 4, kind: output, shape index: {}]
  %s5 = sld [smem:[#allocation0]]
  $region57: #{tpu_custom_call.1} parent=0
    _
  %s7 = ssub.s32 1, %s5
  %s8 = scalar_select 0, %s7, %s5
  $region1: #{tpu_custom_call.1} parent=0
    #allocation2 [shape = 'u8[65536]{0}', space=vmem, size = 0x10000, scoped, tag = 'input window, operand 0']
    #allocation3 [shape = 's32[2]{0}', space=sflag, size = 0x8, scoped, tag = 'scoped memory for tpu_custom_call.1']
    #allocation4 [shape = 's32[2]{0}', space=sflag, size = 0x8, scoped, tag = 'scoped memory for tpu_custom_call.1']
    #allocation5 [shape = 'u8[24576]{0}', space=vmem, size = 0x6000, scoped, tag = 'output window, operand 0']
    %9 = vsyncpa [#allocation3], 0
    %s10 = scalar_lea.sflag [#allocation3], 1
    %11 = vsyncpa %s10, 0
    %12 = vsyncpa [#allocation4], 0
    %s13 = scalar_lea.sflag [#allocation4], 1
    %14 = vsyncpa %s13, 0
    loop: start=0, step=1, limit=4
    $region2: #{tpu_custom_call.1} parent=1 // loop_pre_header
      _
    $region3: #{tpu_custom_call.1} parent=1 // loop_header
      %s16 = sphi 0, %s20
      %p17 = scmp.ge.s32.totalorder %s16, 4
      %s23 = sphi 0, %s42
      %s24 = sphi 0, %s38
      %s25 = sphi 0, %s34
      %s26 = sphi 0, %s23
      %s27 = sphi 0, %s24
      %s28 = sphi 0, %s25
      %s29 = sphi 0, %s26
      %s30 = sphi 0, %s27
      %s31 = sphi 0, %s28
      %s49 = sphi 0, %s51
      %s52 = sphi 0, %s49
      %s53 = sphi 0, %s52
      %s69 = sphi 0, %s53
      %s79 = sphi 0, %s81
      %s82 = sphi 0, %s79
      %s83 = sphi 0, %s82
      %s99 = sphi 0, %s83
      %s107 = sphi 0, %s109
      %s110 = sphi 0, %s107
      %s111 = sphi 0, %s110
      %s127 = sphi 0, %s111
      %s135 = sphi 0, %s137
      %s138 = sphi 0, %s135
      %s139 = sphi 0, %s138
      %s155 = sphi 0, %s139
      %s163 = sphi 0, %s165
      %s166 = sphi 0, %s163
      %s167 = sphi 0, %s166
      %s183 = sphi 0, %s167
    $region4: #{tpu_custom_call.1} parent=1 // loop_header_branch
      %19 = sbr.rel (%p17) target = $region8
    $region5: #{tpu_custom_call.1} parent=1 // loop_body
      %s21 = ssub.s32 %s16, 1
      %s22 = ssub.s32 %s16, 2
      %s32 = sadd.s32 1, %s25
      %p33 = scmp.ge.s32.totalorder %s32, 1
      %s34 = scalar_select %p33, 0, %s32
      %s35 = sadd.s32 1, %s24
      %s36 = scalar_select %p33, %s35, %s24
      %p37 = scmp.ge.s32.totalorder %s36, 1
      %s38 = scalar_select %p37, 0, %s36
      %s39 = sadd.s32 1, %s23
      %s40 = scalar_select %p37, %s39, %s23
      %p41 = scmp.ge.s32.totalorder %s40, 2
      %s42 = scalar_select %p41, 0, %s40
      %s43 = ssub.s32 %s23, %s42
      %s44 = ssub.s32 %s25, %s34
      %s45 = sor.u32 %s43, %s44
      %s46 = ssub.s32 %s24, %s38
      %s47 = sor.u32 %s45, %s46
      %p48 = scmp.eq.s32.totalorder %s47, 0
      %s50 = sadd.s32 %s49, 1
      %s51 = scalar_select %p48, %s49, %s50
      %p54 = pneg %p48
      %p55 = scmp.eq.s32.totalorder %s16, 1
      %p56 = por %p54, %p55
      %p57 = scmp.ne.s32.totalorder %s49, %s52
      %p58 = scmp.eq.s32.totalorder %s16, 0
      %p59 = por %p57, %p58
      %p60 = scmp.ne.s32.totalorder %s49, %s52
      %p61 = scmp.eq.s32.totalorder %s21, 1
      %p62 = por %p60, %p61
      %p63 = scmp.ne.s32.totalorder %s52, %s53
      %p64 = scmp.eq.s32.totalorder %s21, 0
      %p65 = por %p63, %p64
      %p66 = scmp.ne.s32.totalorder %s52, %s53
      %p67 = scmp.eq.s32.totalorder %s22, 1
      %p68 = por %p66, %p67
      %p70 = scmp.ne.s32.totalorder %s53, %s69
      %p71 = scmp.eq.s32.totalorder %s22, 0
      %p72 = por %p70, %p71
      %s73 = ssub.s32 %s23, %s42
      %s74 = ssub.s32 %s25, %s34
      %s75 = sor.u32 %s73, %s74
      %s76 = ssub.s32 %s24, %s38
      %s77 = sor.u32 %s75, %s76
      %p78 = scmp.eq.s32.totalorder %s77, 0
      %s80 = sadd.s32 %s79, 1
      %s81 = scalar_select %p78, %s79, %s80
      %p84 = pneg %p78
      %p85 = scmp.eq.s32.totalorder %s16, 1
      %p86 = por %p84, %p85
      %p87 = scmp.ne.s32.totalorder %s79, %s82
      %p88 = scmp.eq.s32.totalorder %s16, 0
      %p89 = por %p87, %p88
      %p90 = scmp.ne.s32.totalorder %s79, %s82
      %p91 = scmp.eq.s32.totalorder %s21, 1
      %p92 = por %p90, %p91
      %p93 = scmp.ne.s32.totalorder %s82, %s83
      %p94 = scmp.eq.s32.totalorder %s21, 0
      %p95 = por %p93, %p94
      %p96 = scmp.ne.s32.totalorder %s82, %s83
      %p97 = scmp.eq.s32.totalorder %s22, 1
      %p98 = por %p96, %p97
      %p100 = scmp.ne.s32.totalorder %s83, %s99
      %p101 = scmp.eq.s32.totalorder %s22, 0
      %p102 = por %p100, %p101
      %s103 = ssub.s32 %s23, %s42
      %s104 = ssub.s32 %s25, %s34
      %s105 = sor.u32 %s103, %s104
      %p106 = scmp.eq.s32.totalorder %s105, 0
      %s108 = sadd.s32 %s107, 1
      %s109 = scalar_select %p106, %s107, %s108
      %p112 = pneg %p106
      %p113 = scmp.eq.s32.totalorder %s16, 1
      %p114 = por %p112, %p113
      %p115 = scmp.ne.s32.totalorder %s107, %s110
      %p116 = scmp.eq.s32.totalorder %s16, 0
      %p117 = por %p115, %p116
      %p118 = scmp.ne.s32.totalorder %s107, %s110
      %p119 = scmp.eq.s32.totalorder %s21, 1
      %p120 = por %p118, %p119
      %p121 = scmp.ne.s32.totalorder %s110, %s111
      %p122 = scmp.eq.s32.totalorder %s21, 0
      %p123 = por %p121, %p122
      %p124 = scmp.ne.s32.totalorder %s110, %s111
      %p125 = scmp.eq.s32.totalorder %s22, 1
      %p126 = por %p124, %p125
      %p128 = scmp.ne.s32.totalorder %s111, %s127
      %p129 = scmp.eq.s32.totalorder %s22, 0
      %p130 = por %p128, %p129
      %s131 = ssub.s32 %s23, %s42
      %s132 = ssub.s32 %s24, %s38
      %s133 = sor.u32 %s131, %s132
      %p134 = scmp.eq.s32.totalorder %s133, 0
      %s136 = sadd.s32 %s135, 1
      %s137 = scalar_select %p134, %s135, %s136
      %p140 = pneg %p134
      %p141 = scmp.eq.s32.totalorder %s16, 1
      %p142 = por %p140, %p141
      %p143 = scmp.ne.s32.totalorder %s135, %s138
      %p144 = scmp.eq.s32.totalorder %s16, 0
      %p145 = por %p143, %p144
      %p146 = scmp.ne.s32.totalorder %s135, %s138
      %p147 = scmp.eq.s32.totalorder %s21, 1
      %p148 = por %p146, %p147
      %p149 = scmp.ne.s32.totalorder %s138, %s139
      %p150 = scmp.eq.s32.totalorder %s21, 0
      %p151 = por %p149, %p150
      %p152 = scmp.ne.s32.totalorder %s138, %s139
      %p153 = scmp.eq.s32.totalorder %s22, 1
      %p154 = por %p152, %p153
      %p156 = scmp.ne.s32.totalorder %s139, %s155
      %p157 = scmp.eq.s32.totalorder %s22, 0
      %p158 = por %p156, %p157
      %s159 = ssub.s32 %s23, %s42
      %s160 = ssub.s32 %s24, %s38
      %s161 = sor.u32 %s159, %s160
      %p162 = scmp.eq.s32.totalorder %s161, 0
      %s164 = sadd.s32 %s163, 1
      %s165 = scalar_select %p162, %s163, %s164
      %p168 = pneg %p162
      %p169 = scmp.eq.s32.totalorder %s16, 1
      %p170 = por %p168, %p169
      %p171 = scmp.ne.s32.totalorder %s163, %s166
      %p172 = scmp.eq.s32.totalorder %s16, 0
      %p173 = por %p171, %p172
      %p174 = scmp.ne.s32.totalorder %s163, %s166
      %p175 = scmp.eq.s32.totalorder %s21, 1
      %p176 = por %p174, %p175
      %p177 = scmp.ne.s32.totalorder %s166, %s167
      %p178 = scmp.eq.s32.totalorder %s21, 0
      %p179 = por %p177, %p178
      %p180 = scmp.ne.s32.totalorder %s166, %s167
      %p181 = scmp.eq.s32.totalorder %s22, 1
      %p182 = por %p180, %p181
      %p184 = scmp.ne.s32.totalorder %s167, %s183
      %p185 = scmp.eq.s32.totalorder %s22, 0
      %p186 = por %p184, %p185
      %p187 = scmp.le.s32.totalorder 1, %s16
      %p188 = scmp.lt.s32.totalorder %s16, 3
      %p189 = pnand %p187, %p188
      %p190 = pneg %p189
      // Predicated region
      $region9: #{tpu_custom_call.1} parent=5 // pred_check
        _
      $region10: #{tpu_custom_call.1} parent=5 // pred_check_branch
        %192 = sbr.rel (%p189) target = $region12
      $region11: #{tpu_custom_call.1} parent=5 // pred_region
        %s193 = ssub.s32 %s16, 1
      $region12: #{tpu_custom_call.1} parent=5 // pred_fallthru
        _
      %p194 = scmp.lt.s32.totalorder %s16, 2
      // Predicated region
      $region13: #{tpu_custom_call.1} parent=5 // pred_check
        %p195 = pneg %p194
      $region14: #{tpu_custom_call.1} parent=5 // pred_check_branch
        %197 = sbr.rel (%p195) target = $region16
      $region15: #{tpu_custom_call.1} parent=5 // pred_region
        // Predicated region
        $region17: #{tpu_custom_call.1} parent=15 // pred_check
          %p198 = pneg %p59
        $region18: #{tpu_custom_call.1} parent=15 // pred_check_branch
          %200 = sbr.rel (%p198) target = $region20
        $region19: #{tpu_custom_call.1} parent=15 // pred_region
          %s201 = sand.u32 %s49, 1
          %s202 = scalar_lea.sflag [#allocation3], %s201
          %s203 = sand.u32 %s49, 1
          %s204 = smul.addr %s203, 64
          %s205 = scalar_lea.vmem [#allocation2], %s204
          %s206 = smul.u32 8, %s25
          %s208 = ssub.s32 1024, 1024
          %209 = vsyncadd %s202, %s208
          %s210 = sadd.s32 %s24, %s206
          %s211 = smul.addr %s23, 8
          %s212 = sadd.s32 %s210, %s211
          %s213 = smul.addr %s212, 128
          %s214 = scalar_lea.hbm %s0, %s213
          %s215 = sshll.u32 %s205, 4
          %s216 = int_to_ptr.vmem [resolvable:$true] %s215
          %221 = dma.hbm_to_vmem [thread:$0]  %s214, 1024, %s216, %s202, 128, 128, 8
        $region20: #{tpu_custom_call.1} parent=15 // pred_fallthru
          _
        // Predicated region
        $region21: #{tpu_custom_call.1} parent=15 // pred_check
          %p222 = pneg %p89
        $region22: #{tpu_custom_call.1} parent=15 // pred_check_branch
          %224 = sbr.rel (%p222) target = $region24
        $region23: #{tpu_custom_call.1} parent=15 // pred_region
          %s225 = smul.u32 8, %s25
          %p226 = scmp.lt.s32.totalorder %s23, 1
          %s227 = scalar_select %p226, %s23, 1
          %p228 = scmp.lt.s32.totalorder %s225, 7
          %s229 = scalar_select %p228, %s225, 7
          %p230 = scmp.lt.s32.totalorder %s24, 0
          %s231 = scalar_select %p230, %s24, 0
          %s232 = sadd.s32 %s231, %s229
          %s233 = smul.addr %s227, 8
          %s234 = sadd.s32 %s232, %s233
          %s235 = smul.addr %s234, 4
          %s236 = scalar_lea.vmem %s1, %s235
          %s237 = smul.u32 8, %s25
        $region24: #{tpu_custom_call.1} parent=15 // pred_fallthru
          _
        // Predicated region
        $region25: #{tpu_custom_call.1} parent=15 // pred_check
          %p238 = pneg %p117
        $region26: #{tpu_custom_call.1} parent=15 // pred_check_branch
          %240 = sbr.rel (%p238) target = $region28
        $region27: #{tpu_custom_call.1} parent=15 // pred_region
          %s241 = smul.u32 8, %s25
          %p242 = scmp.lt.s32.totalorder %s23, 1
          %s243 = scalar_select %p242, %s23, 1
          %p244 = scmp.lt.s32.totalorder %s241, 7
          %s245 = scalar_select %p244, %s241, 7
          %s246 = smul.addr %s243, 8
          %s247 = sadd.s32 %s245, %s246
          %s248 = smul.addr %s247, 4
          %s249 = scalar_lea.vmem %s2, %s248
          %s250 = smul.u32 8, %s25
        $region28: #{tpu_custom_call.1} parent=15 // pred_fallthru
          _
        // Predicated region
        $region29: #{tpu_custom_call.1} parent=15 // pred_check
          %p251 = pneg %p145
        $region30: #{tpu_custom_call.1} parent=15 // pred_check_branch
          %253 = sbr.rel (%p251) target = $region32
        $region31: #{tpu_custom_call.1} parent=15 // pred_region
          %p254 = scmp.lt.s32.totalorder %s23, 1
          %s255 = scalar_select %p254, %s23, 1
          %p256 = scmp.lt.s32.totalorder %s24, 0
          %s257 = scalar_select %p256, %s24, 0
          %s258 = sadd.s32 %s257, %s255
          %s259 = scalar_lea.vmem %s3, %s258
        $region32: #{tpu_custom_call.1} parent=15 // pred_fallthru
          _
      $region16: #{tpu_custom_call.1} parent=5 // pred_fallthru
        _
      %p260 = scmp.le.s32.totalorder 1, %s16
      %p261 = scmp.lt.s32.totalorder %s16, 3
      %p262 = pnand %p260, %p261
      %p263 = pneg %p262
      // Predicated region
      $region33: #{tpu_custom_call.1} parent=5 // pred_check
        _
      $region34: #{tpu_custom_call.1} parent=5 // pred_check_branch
        %265 = sbr.rel (%p262) target = $region36
      $region35: #{tpu_custom_call.1} parent=5 // pred_region
        %s266 = ssub.s32 %s16, 1
        %s267 = sand.u32 %s52, 1
        %s268 = scalar_lea.sflag [#allocation3], %s267
        %s269 = sand.u32 %s52, 1
        %s270 = smul.addr %s269, 64
        %s271 = scalar_lea.vmem [#allocation2], %s270
        // Predicated region
        $region37: #{tpu_custom_call.1} parent=35 // pred_check
          %p272 = pneg %p65
        $region38: #{tpu_custom_call.1} parent=35 // pred_check_branch
          %274 = sbr.rel (%p272) target = $region40
        $region39: #{tpu_custom_call.1} parent=35 // pred_region
          %275 = dma.done %s268, 1024
        $region40: #{tpu_custom_call.1} parent=35 // pred_fallthru
          _
        %s276 = sand.u32 %s52, 1
        %s277 = scalar_lea.sflag [#allocation3], %s276
        %s278 = sand.u32 %s52, 1
        %s279 = smul.addr %s278, 64
        %s280 = scalar_lea.vmem [#allocation2], %s279
        %p281 = pneg %p65
        %p282 = pneg %p62
        %s283 = smul.u32 8, %s28
        %p284 = scmp.lt.s32.totalorder %s26, 1
        %s285 = scalar_select %p284, %s26, 1
        %p286 = scmp.lt.s32.totalorder %s283, 7
        %s287 = scalar_select %p286, %s283, 7
        %p288 = scmp.lt.s32.totalorder %s27, 0
        %s289 = scalar_select %p288, %s27, 0
        %s290 = sadd.s32 %s289, %s287
        %s291 = smul.addr %s285, 8
        %s292 = sadd.s32 %s290, %s291
        %s293 = smul.addr %s292, 4
        %s294 = scalar_lea.vmem %s1, %s293
        %p295 = pneg %p95
        %p296 = pneg %p92
        %s297 = smul.u32 8, %s28
        %p298 = scmp.lt.s32.totalorder %s26, 1
        %s299 = scalar_select %p298, %s26, 1
        %p300 = scmp.lt.s32.totalorder %s297, 7
        %s301 = scalar_select %p300, %s297, 7
        %s302 = smul.addr %s299, 8
        %s303 = sadd.s32 %s301, %s302
        %s304 = smul.addr %s303, 4
        %s305 = scalar_lea.vmem %s2, %s304
        %p306 = pneg %p123
        %p307 = pneg %p120
        %p308 = scmp.lt.s32.totalorder %s26, 1
        %s309 = scalar_select %p308, %s26, 1
        %p310 = scmp.lt.s32.totalorder %s27, 0
        %s311 = scalar_select %p310, %s27, 0
        %s312 = sadd.s32 %s311, %s309
        %s313 = scalar_lea.vmem %s3, %s312
        %p314 = pneg %p151
        %p315 = pneg %p148
        %p316 = pneg %p179
        %p317 = pneg %p176
        %s318 = sand.u32 %s166, 1
        %s319 = scalar_lea.sflag [#allocation4], %s318
        %s320 = sand.u32 %s166, 1
        %s321 = smul.addr %s320, 24
        %s322 = scalar_lea.vmem [#allocation5], %s321
        %s323 = smul.u32 8, %s28
        %s324 = smul.u32 8, %s28
        %p325 = scmp.lt.s32.totalorder %s26, 1
        %s326 = scalar_select %p325, %s26, 1
        %p327 = scmp.lt.s32.totalorder %s324, 7
        %s328 = scalar_select %p327, %s324, 7
        %p329 = scmp.lt.s32.totalorder %s27, 0
        %s330 = scalar_select %p329, %s27, 0
        %s331 = sadd.s32 %s330, %s328
        %s332 = smul.addr %s326, 8
        %s333 = sadd.s32 %s331, %s332
        %s334 = smul.addr %s333, 4
        %s335 = scalar_lea.vmem %s1, %s334
        %s336 = smul.u32 8, %s28
        %s337 = smul.u32 8, %s28
        %p338 = scmp.lt.s32.totalorder %s26, 1
        %s339 = scalar_select %p338, %s26, 1
        %p340 = scmp.lt.s32.totalorder %s337, 7
        %s341 = scalar_select %p340, %s337, 7
        %s342 = smul.addr %s339, 8
        %s343 = sadd.s32 %s341, %s342
        %s344 = smul.addr %s343, 4
        %s345 = scalar_lea.vmem %s2, %s344
        %s346 = smul.u32 8, %s28
        %p347 = scmp.lt.s32.totalorder %s26, 1
        %s348 = scalar_select %p347, %s26, 1
        %p349 = scmp.lt.s32.totalorder %s27, 0
        %s350 = scalar_select %p349, %s27, 0
        %s351 = sadd.s32 %s350, %s348
        %s352 = scalar_lea.vmem %s3, %s351
        %p353 = scmp.eq.s32.totalorder %s28, 0
        // Predicated region
        $region41: #{tpu_custom_call.1} parent=35 // pred_check
          %p354 = pneg %p353
        $region42: #{tpu_custom_call.1} parent=35 // pred_check_branch
          %356 = sbr.rel (%p354) target = $region44
        $region43: #{tpu_custom_call.1} parent=35 // pred_region
          %vm357 = vcmask 523264
          %358 = vst.msk [vmem:[%s322] sm:$0xff] %vm357, 0.0
          %359 = vst.msk [vmem:[%s322 + $0x8] sm:$0xff] %vm357, 0.0
          %360 = vst.msk [vmem:[%s322 + $0x10] sm:$0xff] %vm357, 0.0
        $region44: #{tpu_custom_call.1} parent=35 // pred_fallthru
          _
        %v361 = vld [vmem:[%s345] sm:$0xf]
        %v362 = vld [vmem:[%s345 + $0x4] sm:$0xf]
        %v363 = vld [vmem:[%s345 + $0x8] sm:$0xf]
        %v364 = vld [vmem:[%s345 + $0xc] sm:$0xf]
        %v365 = vld [vmem:[%s345 + $0x10] sm:$0xf]
        %v366 = vld [vmem:[%s345 + $0x14] sm:$0xf]
        %v367 = vld [vmem:[%s345 + $0x18] sm:$0xf]
        %v368 = vld [vmem:[%s345 + $0x1c] sm:$0xf]
        %v369 = vunpack.c.l.bf16 %v361
        %v370 = vunpack.c.l.bf16 %v362
        %v371 = vunpack.c.l.bf16 %v363
        %v372 = vunpack.c.l.bf16 %v364
        %v373 = vunpack.c.l.bf16 %v365
        %v374 = vunpack.c.l.bf16 %v366
        %v375 = vunpack.c.l.bf16 %v367
        %v376 = vunpack.c.l.bf16 %v368
        %v377 = vld [vmem:[%s352] sm:$0x1]
        %v378 = vunpack.c.l.bf16 %v377
        %380 = vset.pattern.permute.xlu0 0
        %381 = vperm.xlu0 %380, %v369
        %v382 = vpop.permute.xlu0 %381
        %385 = vset.pattern.permute.xlu0 0
        %386 = vperm.xlu0 %385, %v370
        %v387 = vpop.permute.xlu0 %386
        %390 = vset.pattern.permute.xlu0 0
        %391 = vperm.xlu0 %390, %v371
        %v392 = vpop.permute.xlu0 %391
        %395 = vset.pattern.permute.xlu0 0
        %396 = vperm.xlu0 %395, %v372
        %v397 = vpop.permute.xlu0 %396
        %400 = vset.pattern.permute.xlu0 0
        %401 = vperm.xlu0 %400, %v373
        %v402 = vpop.permute.xlu0 %401
        %405 = vset.pattern.permute.xlu0 0
        %406 = vperm.xlu0 %405, %v374
        %v407 = vpop.permute.xlu0 %406
        %410 = vset.pattern.permute.xlu0 0
        %411 = vperm.xlu0 %410, %v375
        %v412 = vpop.permute.xlu0 %411
        %415 = vset.pattern.permute.xlu0 0
        %416 = vperm.xlu0 %415, %v376
        %v417 = vpop.permute.xlu0 %416
        %v419 = vlaneseq
        %v420 = vshrl.u32 %v419, 7
        %v421 = vsub.s32 0, %v420
        %v422 = vrot.slane %v378, %v421
        %v423 = vmul.f32 %v382, %v422
        %v424 = vmul.f32 %v387, %v422
        %v425 = vmul.f32 %v392, %v422
        %v426 = vmul.f32 %v397, %v422
        %v427 = vmul.f32 %v402, %v422
        %v428 = vmul.f32 %v407, %v422
        %v429 = vmul.f32 %v412, %v422
        %v430 = vmul.f32 %v417, %v422
        %v431 = vld [vmem:[%s271] sm:$0xff]
        %v432 = vld [vmem:[%s271 + $0x8] sm:$0xff]
        %v433 = vld [vmem:[%s271 + $0x10] sm:$0xff]
        %v434 = vld [vmem:[%s271 + $0x18] sm:$0xff]
        %v435 = vld [vmem:[%s271 + $0x20] sm:$0xff]
        %v436 = vld [vmem:[%s271 + $0x28] sm:$0xff]
        %v437 = vld [vmem:[%s271 + $0x30] sm:$0xff]
        %v438 = vld [vmem:[%s271 + $0x38] sm:$0xff]
        %v439 = vld [vmem:[%s335] sm:$0xf]
        %v440 = vld [vmem:[%s335 + $0x4] sm:$0xf]
        %v441 = vld [vmem:[%s335 + $0x8] sm:$0xf]
        %v442 = vld [vmem:[%s335 + $0xc] sm:$0xf]
        %v443 = vld [vmem:[%s335 + $0x10] sm:$0xf]
        %v444 = vld [vmem:[%s335 + $0x14] sm:$0xf]
        %v445 = vld [vmem:[%s335 + $0x18] sm:$0xf]
        %v446 = vld [vmem:[%s335 + $0x1c] sm:$0xf]
        %v447 = vmax.f32 %v431, 1e-06
        %v448 = vmax.f32 %v432, 1e-06
        %v449 = vmax.f32 %v433, 1e-06
        %v450 = vmax.f32 %v434, 1e-06
        %v451 = vmax.f32 %v435, 1e-06
        %v452 = vmax.f32 %v436, 1e-06
        %v453 = vmax.f32 %v437, 1e-06
        %v454 = vmax.f32 %v438, 1e-06
        %v455 = vmin.f32 %v447, 0.999999
        %v456 = vmin.f32 %v448, 0.999999
        %v457 = vmin.f32 %v449, 0.999999
        %v458 = vmin.f32 %v450, 0.999999
        %v459 = vmin.f32 %v451, 0.999999
        %v460 = vmin.f32 %v452, 0.999999
        %v461 = vmin.f32 %v453, 0.999999
        %v462 = vmin.f32 %v454, 0.999999
        %v463 = vunpack.c.l.bf16 %v439
        %v464 = vunpack.c.l.bf16 %v440
        %v465 = vunpack.c.l.bf16 %v441
        %v466 = vunpack.c.l.bf16 %v442
        %v467 = vunpack.c.l.bf16 %v443
        %v468 = vunpack.c.l.bf16 %v444
        %v469 = vunpack.c.l.bf16 %v445
        %v470 = vunpack.c.l.bf16 %v446
        %vm471 = vcmp.eq.f32.partialorder %v463, 1.0
        %vm472 = vcmp.eq.f32.partialorder %v464, 1.0
        %vm473 = vcmp.eq.f32.partialorder %v465, 1.0
        %vm474 = vcmp.eq.f32.partialorder %v466, 1.0
        %vm475 = vcmp.eq.f32.partialorder %v467, 1.0
        %vm476 = vcmp.eq.f32.partialorder %v468, 1.0
        %vm477 = vcmp.eq.f32.partialorder %v469, 1.0
        %vm478 = vcmp.eq.f32.partialorder %v470, 1.0
        %v479 = vsub.f32 1.0, %v455
        %v480 = vsub.f32 1.0, %v456
        %v481 = vsub.f32 1.0, %v457
        %v482 = vsub.f32 1.0, %v458
        %v483 = vsub.f32 1.0, %v459
        %v484 = vsub.f32 1.0, %v460
        %v485 = vsub.f32 1.0, %v461
        %v486 = vsub.f32 1.0, %v462
        %v487 = vsel %vm471, %v455, %v479
        %v488 = vsel %vm472, %v456, %v480
        %v489 = vsel %vm473, %v457, %v481
        %v490 = vsel %vm474, %v458, %v482
        %v491 = vsel %vm475, %v459, %v483
        %v492 = vsel %vm476, %v460, %v484
        %v493 = vsel %vm477, %v461, %v485
        %v494 = vsel %vm478, %v462, %v486
        %v495 = vsub.f32 1.0, %v487
        %v496 = vsub.f32 1.0, %v488
        %v497 = vsub.f32 1.0, %v489
        %v498 = vsub.f32 1.0, %v490
        %v499 = vsub.f32 1.0, %v491
        %v500 = vsub.f32 1.0, %v492
        %v501 = vsub.f32 1.0, %v493
        %v502 = vsub.f32 1.0, %v494
        %v503 = vmul.f32 %v495, %v495
        %v504 = vmul.f32 %v496, %v496
        %v505 = vmul.f32 %v497, %v497
        %v506 = vmul.f32 %v498, %v498
        %v507 = vmul.f32 %v499, %v499
        %v508 = vmul.f32 %v500, %v500
        %v509 = vmul.f32 %v501, %v501
        %v510 = vmul.f32 %v502, %v502
        %v511 = vlog2.pop %v487
        %v512 = vmul.f32 %v511, 0.6931472
        %v513 = vlog2.pop %v488
        %v514 = vmul.f32 %v513, 0.6931472
        %v515 = vlog2.pop %v489
        %v516 = vmul.f32 %v515, 0.6931472
        %v517 = vlog2.pop %v490
        %v518 = vmul.f32 %v517, 0.6931472
        %v519 = vlog2.pop %v491
        %v520 = vmul.f32 %v519, 0.6931472
        %v521 = vlog2.pop %v492
        %v522 = vmul.f32 %v521, 0.6931472
        %v523 = vlog2.pop %v493
        %v524 = vmul.f32 %v523, 0.6931472
        %v525 = vlog2.pop %v494
        %v526 = vmul.f32 %v525, 0.6931472
        %v527 = vmul.f32 %v503, %v512
        %v528 = vmul.f32 %v504, %v514
        %v529 = vmul.f32 %v505, %v516
        %v530 = vmul.f32 %v506, %v518
        %v531 = vmul.f32 %v507, %v520
        %v532 = vmul.f32 %v508, %v522
        %v533 = vmul.f32 %v509, %v524
        %v534 = vmul.f32 %v510, %v526
        %v535 = vmul.f32 %v527, %v423
        %v536 = vmul.f32 %v528, %v424
        %v537 = vmul.f32 %v529, %v425
        %v538 = vmul.f32 %v530, %v426
        %v539 = vmul.f32 %v531, %v427
        %v540 = vmul.f32 %v532, %v428
        %v541 = vmul.f32 %v533, %v429
        %v542 = vmul.f32 %v534, %v430
        %v543 = vmul.f32 %v535, %v463
        %v544 = vmul.f32 %v536, %v464
        %v545 = vmul.f32 %v537, %v465
        %v546 = vmul.f32 %v538, %v466
        %v547 = vmul.f32 %v539, %v467
        %v548 = vmul.f32 %v540, %v468
        %v549 = vmul.f32 %v541, %v469
        %v550 = vmul.f32 %v542, %v470
        %v551 = vsub.f32 %v535, %v543
        %v552 = vsub.f32 %v536, %v544
        %v553 = vsub.f32 %v537, %v545
        %v554 = vsub.f32 %v538, %v546
        %v555 = vsub.f32 %v539, %v547
        %v556 = vsub.f32 %v540, %v548
        %v557 = vsub.f32 %v541, %v549
        %v558 = vsub.f32 %v542, %v550
        %v559 = vld [vmem:[%s322] sm:$0xff]
        %vm560 = vcmask 523264
        %v561 = vsel %vm560, %v543, 0.0
        %v562 = vsel %vm560, %v544, 0.0
        %v563 = vadd.f32 %v561, %v562
        %v564 = vsel %vm560, %v545, 0.0
        %v565 = vadd.f32 %v563, %v564
        %v566 = vsel %vm560, %v546, 0.0
        %v567 = vadd.f32 %v565, %v566
        %v568 = vsel %vm560, %v547, 0.0
        %v569 = vadd.f32 %v567, %v568
        %v570 = vsel %vm560, %v548, 0.0
        %v571 = vadd.f32 %v569, %v570
        %v572 = vsel %vm560, %v549, 0.0
        %v573 = vadd.f32 %v571, %v572
        %v574 = vsel %vm560, %v550, 0.0
        %v575 = vadd.f32 %v573, %v574
        %v576 = vadd.f32 %v559, %v575
        %577 = vst.msk [vmem:[%s322] sm:$0xff] %vm560, %v576
        %s578 = scalar_lea.vmem %s322, 8 [#allocation5]
        %v579 = vld [vmem:[%s578] sm:$0xff]
        %v580 = vsel %vm560, %v551, 0.0
        %v581 = vsel %vm560, %v552, 0.0
        %v582 = vadd.f32 %v580, %v581
        %v583 = vsel %vm560, %v553, 0.0
        %v584 = vadd.f32 %v582, %v583
        %v585 = vsel %vm560, %v554, 0.0
        %v586 = vadd.f32 %v584, %v585
        %v587 = vsel %vm560, %v555, 0.0
        %v588 = vadd.f32 %v586, %v587
        %v589 = vsel %vm560, %v556, 0.0
        %v590 = vadd.f32 %v588, %v589
        %v591 = vsel %vm560, %v557, 0.0
        %v592 = vadd.f32 %v590, %v591
        %v593 = vsel %vm560, %v558, 0.0
        %v594 = vadd.f32 %v592, %v593
        %v595 = vadd.f32 %v579, %v594
        %596 = vst.msk [vmem:[%s578] sm:$0xff] %vm560, %v595
        %s597 = scalar_lea.vmem %s322, 16 [#allocation5]
        %v598 = vld [vmem:[%s597] sm:$0xff]
        %v599 = vsel %vm560, %v463, 0.0
        %v600 = vsel %vm560, %v464, 0.0
        %v601 = vadd.f32 %v599, %v600
        %v602 = vsel %vm560, %v465, 0.0
        %v603 = vadd.f32 %v601, %v602
        %v604 = vsel %vm560, %v466, 0.0
        %v605 = vadd.f32 %v603, %v604
        %v606 = vsel %vm560, %v467, 0.0
        %v607 = vadd.f32 %v605, %v606
        %v608 = vsel %vm560, %v468, 0.0
        %v609 = vadd.f32 %v607, %v608
        %v610 = vsel %vm560, %v469, 0.0
        %v611 = vadd.f32 %v609, %v610
        %v612 = vsel %vm560, %v470, 0.0
        %v613 = vadd.f32 %v611, %v612
        %v614 = vadd.f32 %v598, %v613
        %615 = vst.msk [vmem:[%s597] sm:$0xff] %vm560, %v614
        %s616 = sand.u32 %s166, 1
        %s617 = scalar_lea.sflag [#allocation4], %s616
        %s618 = sand.u32 %s166, 1
        %s619 = smul.addr %s618, 24
        %s620 = scalar_lea.vmem [#allocation5], %s619
        // Predicated region
        $region45: #{tpu_custom_call.1} parent=35 // pred_check
          %p621 = pneg %p176
        $region46: #{tpu_custom_call.1} parent=35 // pred_check_branch
          %623 = sbr.rel (%p621) target = $region48
        $region47: #{tpu_custom_call.1} parent=35 // pred_region
          %s625 = ssub.s32 384, 384
          %626 = vsyncadd %s617, %s625
          %s627 = smul.addr %s26, 3
          %s628 = sadd.s32 %s27, %s627
          %s629 = smul.addr %s628, 128
          %s630 = scalar_lea.hbm %s4, %s629
          %s631 = sshll.u32 %s620, 4
          %s632 = int_to_ptr.vmem [resolvable:$true] %s631
          %637 = dma.vmem_to_hbm [thread:$0]  %s632, 384, %s630, %s617, 128, 128, 8
        $region48: #{tpu_custom_call.1} parent=35 // pred_fallthru
          _
      $region36: #{tpu_custom_call.1} parent=5 // pred_fallthru
        _
      %p638 = scmp.le.s32.totalorder 2, %s16
      // Predicated region
      $region49: #{tpu_custom_call.1} parent=5 // pred_check
        %p639 = pneg %p638
      $region50: #{tpu_custom_call.1} parent=5 // pred_check_branch
        %641 = sbr.rel (%p639) target = $region52
      $region51: #{tpu_custom_call.1} parent=5 // pred_region
        %s642 = ssub.s32 %s16, 2
        // Predicated region
        $region53: #{tpu_custom_call.1} parent=51 // pred_check
          %p643 = pneg %p182
        $region54: #{tpu_custom_call.1} parent=51 // pred_check_branch
          %645 = sbr.rel (%p643) target = $region56
        $region55: #{tpu_custom_call.1} parent=51 // pred_region
          %s646 = sand.u32 %s167, 1
          %s647 = scalar_lea.sflag [#allocation4], %s646
          %s648 = sand.u32 %s167, 1
          %s649 = smul.addr %s648, 24
          %s650 = scalar_lea.vmem [#allocation5], %s649
          %651 = dma.done %s647, 384
        $region56: #{tpu_custom_call.1} parent=51 // pred_fallthru
          _
      $region52: #{tpu_custom_call.1} parent=5 // pred_fallthru
        _
    $region6: #{tpu_custom_call.1} parent=1 // loop_footer
      %s20 = sadd.s32 1, %s16
    $region7: #{tpu_custom_call.1} parent=1 // loop_footer_branch
      %15 = sbr.rel target = $region3
    $region8: #{tpu_custom_call.1} parent=1 // loop_exit
      _
    %652 = vsyncpa [#allocation3], 1
    %s653 = scalar_lea.sflag [#allocation3], 1
    %654 = vsyncpa %s653, 1
    %655 = vsyncpa [#allocation4], 1
    %s656 = scalar_lea.sflag [#allocation4], 1
    %657 = vsyncpa %s656, 1

</llo_original>
